<compile_context>
chip_gen: v5e
topology: v5e:2x2
jax: 0.10.0
libtpu: 0.0.40
codegen_flags: <defaults>
</compile_context>

<pallas_src>
import jax
import jax.numpy as jnp
from jax.experimental import pallas as pl
from jax.experimental.pallas import tpu as pltpu


def _round_up(n, m):
    return ((n + m - 1) // m) * m


def _tpu_defaults():
    """(vmem_limit_bytes, tensorcores_per_chip) for the current TPU generation."""
    try:
        kind = jax.devices()[0].device_kind.lower()
    except Exception:
        kind = ""
    if "v7" in kind:
        return 48 * 1024 * 1024, 2      # 64 MiB/TC physical; leave compiler headroom
    if "v5" in kind or "v6" in kind:
        return 96 * 1024 * 1024, 1      # 128 MiB physical VMEM, single TC
    if "v4" in kind:
        return 64 * 1024 * 1024, 1
    return 16 * 1024 * 1024, 1          # conservative for older / unknown parts


def _derive_tile_b(S, Hp, vmem_limit):
    """Largest 128-multiple batch tile that fits the VMEM budget."""
    lane_s = max(_round_up(S, 128), 128)            # x tile is lane-padded to >=128
    per_row = 2 * lane_s * 4 + 2 * 8 * 4            # 2x-buffered x row + 2x-buffered out row
    weight_bytes = 2 * (S * Hp + 2 * 8 * Hp + 8 * 128) * 4   # W1, b1, w2 (2x-buffered, conservative)
    budget = int(vmem_limit * 0.75) - weight_bytes
    tile_b = max(128, budget // per_row)
    tile_b = min(tile_b, 65536)
    return (tile_b // 128) * 128


def valuenet_kernel(x_ref, w1_ref, b1_ref, w2_ref, b2_ref, o_ref):
    # x_ref: (TILE_B, S)  w1_ref: (S, Hp)  b1_ref/w2_ref: (1, Hp)  b2_ref: (1,1) SMEM
    x = x_ref[...]
    # First layer on the MXU, f32 accumulation.
    h = jnp.dot(x, w1_ref[...], preferred_element_type=jnp.float32)   # (TILE_B, Hp)
    h = jnp.maximum(h + b1_ref[...], 0.0)                             # ReLU
    # Second layer (H -> 1) on the VPU: elementwise mul + lane reduction.
    v = jnp.sum(h * w2_ref[...], axis=-1) + b2_ref[0, 0]              # (TILE_B,)
    # Lane-dense store: batch on the lane axis of a (1, 1, TILE_B) block.
    o_ref[0, 0, :] = v


def _pallas_forward(x_arr, w1p, b1p, w2p, b2p, tile_b, num_tiles, vmem_limit):
    """Run the kernel over blocks [0, num_tiles) of x_arr; returns (num_tiles*tile_b,)."""
    _, S = x_arr.shape
    _, Hp = w1p.shape
    rows = num_tiles * tile_b
    cost = pl.CostEstimate(
        flops=2 * rows * S * Hp + 3 * rows * Hp,
        transcendentals=0,
        bytes_accessed=rows * S * 4 + rows * 4 + (S * Hp + 2 * Hp + 1) * 4,
    )
    out = pl.pallas_call(
        valuenet_kernel,
        out_shape=jax.ShapeDtypeStruct((num_tiles, 1, tile_b), jnp.float32),
        grid=(num_tiles,),
        in_specs=[
            pl.BlockSpec((tile_b, S), lambda i: (i, 0)),           # x tile (pipelined)
            pl.BlockSpec((S, Hp), lambda i: (0, 0)),               # W1 resident
            pl.BlockSpec((1, Hp), lambda i: (0, 0)),               # b1 resident
            pl.BlockSpec((1, Hp), lambda i: (0, 0)),               # w2 row resident
            pl.BlockSpec(memory_space=pltpu.MemorySpace.SMEM),     # b2 scalar
        ],
        out_specs=pl.BlockSpec((1, 1, tile_b), lambda i: (i, 0, 0)),
        compiler_params=pltpu.CompilerParams(
            dimension_semantics=("parallel",),
            vmem_limit_bytes=vmem_limit,
        ),
        cost_estimate=cost,
    )(x_arr, w1p, b1p, w2p, b2p)
    # (num_tiles, 1, tile_b) row-major == batch order.
    return out.reshape(rows)


def value_net_forward(x, params, *, tile_b=None):
    """x: (B, S) f32; params = (w1p:(S,Hp), b1p:(1,Hp), w2p:(1,Hp), b2p:(1,1)).

    Returns (B, 1) f32, matching ValueNet.forward.
    """
    w1p, b1p, w2p, b2p = params
    B, S = x.shape
    S_w, Hp = w1p.shape
    assert S == S_w, "x feature dim must match W1"

    vmem_limit, num_tc = _tpu_defaults()
    if tile_b is None:
        tile_b = _derive_tile_b(S, Hp, vmem_limit)
    # Defensive: force any tile size to a multiple of 128 (lane-dense output store).
    tile_b = max(128, _round_up(int(tile_b), 128))
    # Cap so that (a) the grid has >= num_tc full tiles (v7x megacore) and
    # (b) the tile is never larger than what B can fill with full tiles.
    per_core = max(128, ((B // max(num_tc, 1)) // 128) * 128)
    tile_b = min(tile_b, per_core)

    num_full = B // tile_b
    main_rows = num_full * tile_b
    pieces = []
    if num_full > 0:
        # Main call reads blocks [0, num_full) of the ORIGINAL x — no pad / slice copy.
        pieces.append(_pallas_forward(x, w1p, b1p, w2p, b2p, tile_b, num_full, vmem_limit))
    rem = B - main_rows
    if rem > 0:
        # Only the (< tile_b)-row tail slice gets padded — a tiny copy.
        rem_pad = _round_up(rem, 128)
        x_tail = jnp.pad(x[main_rows:], ((0, rem_pad - rem), (0, 0)))
        tail = _pallas_forward(x_tail, w1p, b1p, w2p, b2p, rem_pad, 1, vmem_limit)
        pieces.append(tail[:rem])

    res = pieces[0] if len(pieces) == 1 else jnp.concatenate(pieces, axis=0)
    return res.reshape(B, 1)


def init_params(key, state_dim, hidden_dim):
    """PyTorch nn.Linear-style init: U(-1/sqrt(fan_in), +1/sqrt(fan_in))."""
    k1, k2, k3, k4 = jax.random.split(key, 4)
    bound1 = 1.0 / jnp.sqrt(jnp.float32(state_dim))
    bound2 = 1.0 / jnp.sqrt(jnp.float32(hidden_dim))
    w1 = jax.random.uniform(k1, (state_dim, hidden_dim), jnp.float32, -bound1, bound1)
    b1 = jax.random.uniform(k2, (hidden_dim,), jnp.float32, -bound1, bound1)
    w2 = jax.random.uniform(k3, (hidden_dim, 1), jnp.float32, -bound2, bound2)
    b2 = jax.random.uniform(k4, (1,), jnp.float32, -bound2, bound2)
    return w1, b1, w2, b2


def prepare_params(w1, b1, w2, b2, *, lane=128):
    """One-time padding of H to a lane multiple (done at init, not per call).

    Feature dim S is NOT padded: a BlockSpec dim equal to the full array dim is legal,
    so we avoid an extra HBM pass over x in the wrapper.
    """
    S, H = w1.shape
    Hp = _round_up(H, lane)
    w1p = jnp.zeros((S, Hp), jnp.float32).at[:, :H].set(w1)
    b1p = jnp.zeros((1, Hp), jnp.float32).at[0, :H].set(b1.reshape(-1))
    w2p = jnp.zeros((1, Hp), jnp.float32).at[0, :H].set(w2.reshape(-1))
    b2p = jnp.asarray(b2, jnp.float32).reshape(1, 1)
    return w1p, b1p, w2p, b2p


if __name__ == "__main__":
    batch, state_dim, hidden_dim = 2, 8, 32

    key = jax.random.PRNGKey(0)
    kx, kp = jax.random.split(key)
    x = jax.random.normal(kx, (batch, state_dim), jnp.float32)

    w1, b1, w2, b2 = init_params(kp, state_dim, hidden_dim)
    params = prepare_params(w1, b1, w2, b2)

    out = value_net_forward(x, params)
    out = jax.block_until_ready(out)

    # Pure-JAX reference of the same math (unpadded weights).
    ref = jnp.maximum(x @ w1 + b1, 0.0) @ w2 + b2
    assert out.shape == (batch, 1)
    assert jnp.allclose(out, ref, atol=1e-5, rtol=1e-5)

    print("KERNEL_OK")
</pallas_src>

<mosaic_0001>
module attributes {stable_mosaic.version = 11 : i64} {
  func.func @valuenet_kernel(%arg0: i32, %arg1: memref<128x8xf32, #tpu.memory_space<vmem>>, %arg2: memref<8x128xf32, #tpu.memory_space<vmem>>, %arg3: memref<1x128xf32, #tpu.memory_space<vmem>>, %arg4: memref<1x128xf32, #tpu.memory_space<vmem>>, %arg5: memref<1x1xf32, #tpu.memory_space<smem>>, %arg6: memref<1x1x128xf32, #tpu.memory_space<vmem>>) attributes {dimension_semantics = [#tpu.dimension_semantics<parallel>], iteration_bounds = array<i64: 1>, scalar_prefetch = 0 : i64, scratch_operands = 0 : i64, tpu.core_type = #tpu.core_type<tc>, window_params = [{transform_indices = @transform_0, window_bounds = array<i64: 128, 8>}, {pipeline_mode = #tpu.pipeline_mode<synchronous>, transform_indices = @transform_1, window_bounds = array<i64: 8, 128>}, {pipeline_mode = #tpu.pipeline_mode<synchronous>, transform_indices = @transform_2, window_bounds = array<i64: 1, 128>}, {pipeline_mode = #tpu.pipeline_mode<synchronous>, transform_indices = @transform_3, window_bounds = array<i64: 1, 128>}, {transform_indices = @transform_4, window_bounds = array<i64: 1, 1>}, {transform_indices = @transform_5, window_bounds = array<i64: 1, 1, 128>}]} {
    %c0 = arith.constant 0 : index
    %c0_0 = arith.constant 0 : index
    %0 = vector.load %arg1[%c0, %c0_0] : memref<128x8xf32, #tpu.memory_space<vmem>>, vector<128x8xf32>
    %c0_1 = arith.constant 0 : index
    %c0_2 = arith.constant 0 : index
    %1 = vector.load %arg2[%c0_1, %c0_2] : memref<8x128xf32, #tpu.memory_space<vmem>>, vector<8x128xf32>
    %cst = arith.constant dense<0.000000e+00> : vector<128x128xf32>
    %2 = tpu.matmul %0, %1, %cst {dimension_numbers = #tpu.dot_dimension_numbers<[1], [0], [0], [1], [0, 0, 1, 1], [], []>} : vector<128x8xf32>, vector<8x128xf32>, vector<128x128xf32> -> vector<128x128xf32>
    %c0_3 = arith.constant 0 : index
    %c0_4 = arith.constant 0 : index
    %3 = vector.load %arg3[%c0_3, %c0_4] : memref<1x128xf32, #tpu.memory_space<vmem>>, vector<1x128xf32>
    %4 = vector.broadcast %3 : vector<1x128xf32> to vector<128x128xf32>
    %5 = arith.addf %2, %4 : vector<128x128xf32>
    %cst_5 = arith.constant 0.000000e+00 : f32
    %6 = vector.broadcast %cst_5 : f32 to vector<128x128xf32>
    %7 = arith.maximumf %5, %6 : vector<128x128xf32>
    %c0_6 = arith.constant 0 : index
    %c0_7 = arith.constant 0 : index
    %8 = vector.load %arg4[%c0_6, %c0_7] : memref<1x128xf32, #tpu.memory_space<vmem>>, vector<1x128xf32>
    %9 = vector.broadcast %8 : vector<1x128xf32> to vector<128x128xf32>
    %10 = arith.mulf %7, %9 : vector<128x128xf32>
    %cst_8 = arith.constant dense<0.000000e+00> : vector<128xf32>
    %11 = vector.multi_reduction <add>, %10, %cst_8 [1] : vector<128x128xf32> to vector<128xf32>
    %c0_9 = arith.constant 0 : index
    %c0_10 = arith.constant 0 : index
    %12 = memref.load %arg5[%c0_9, %c0_10] : memref<1x1xf32, #tpu.memory_space<smem>>
    %13 = vector.broadcast %12 : f32 to vector<128xf32>
    %14 = arith.addf %11, %13 : vector<128xf32>
    %c0_11 = arith.constant 0 : index
    %c0_12 = arith.constant 0 : index
    %c0_13 = arith.constant 0 : index
    %15 = vector.load %arg6[%c0_11, %c0_12, %c0_13] : memref<1x1x128xf32, #tpu.memory_space<vmem>>, vector<1x1x128xf32>
    %16 = vector.shape_cast %15 : vector<1x1x128xf32> to vector<128xf32>
    %17 = vector.shape_cast %14 : vector<128xf32> to vector<1x1x128xf32>
    tpu.vector_store %arg6[%c0_11, %c0_12, %c0_13], %17 {strides = array<i32>} : memref<1x1x128xf32, #tpu.memory_space<vmem>>, vector<1x1x128xf32>,
    return
  }
  func.func @transform_0(%arg0: i32) -> (i32, i32) {
    %c0_i32 = arith.constant 0 : i32
    %c0_i32_0 = arith.constant 0 : i32
    return %arg0, %c0_i32 : i32, i32
  }
  func.func @transform_1(%arg0: i32) -> (i32, i32) {
    %c0_i32 = arith.constant 0 : i32
    %c0_i32_0 = arith.constant 0 : i32
    %c0_i32_1 = arith.constant 0 : i32
    return %c0_i32, %c0_i32_0 : i32, i32
  }
  func.func @transform_2(%arg0: i32) -> (i32, i32) {
    %c0_i32 = arith.constant 0 : i32
    %c0_i32_0 = arith.constant 0 : i32
    %c0_i32_1 = arith.constant 0 : i32
    return %c0_i32, %c0_i32_0 : i32, i32
  }
  func.func @transform_3(%arg0: i32) -> (i32, i32) {
    %c0_i32 = arith.constant 0 : i32
    %c0_i32_0 = arith.constant 0 : i32
    %c0_i32_1 = arith.constant 0 : i32
    return %c0_i32, %c0_i32_0 : i32, i32
  }
  func.func @transform_4(%arg0: i32) -> (i32, i32) {
    %c0_i32 = arith.constant 0 : i32
    %c0_i32_0 = arith.constant 0 : i32
    %c0_i32_1 = arith.constant 0 : i32
    return %c0_i32, %c0_i32_0 : i32, i32
  }
  func.func @transform_5(%arg0: i32) -> (i32, i32, i32) {
    %c0_i32 = arith.constant 0 : i32
    %c0_i32_0 = arith.constant 0 : i32
    %c0_i32_1 = arith.constant 0 : i32
    return %arg0, %c0_i32, %c0_i32_0 : i32, i32, i32
  }
}

</mosaic_0001>

<llo_original>
// kernel: tpu_custom_call.1
$region0: #{tpu_custom_call.1}
  #allocation0 [shape = 'u32[]', space=smem, size = 0x4, offset = 0x4, fixed_abs, tag = 'smem constant byte address 0x4 - core index']
  #allocation1 [shape = 'u32[72,128]{1,0:T(1,128)}', space=vmem, size = 0x9000, scoped, tag = 'internal scratch']
  #allocation2 [shape = 'f32[1,1]{1,0:T(1,128)S(6)}', space=smem, size = 0x200, scoped, tag = 'scoped memory for tpu_custom_call.1']
  %s0 = inlined_call_operand.vmem [shape: f32[128,8], index: 0, kind: input, shape index: {}]
  %s1 = inlined_call_operand.vmem [shape: f32[8,128], index: 1, kind: input, shape index: {}]
  %s2 = inlined_call_operand.vmem [shape: f32[1,128], index: 2, kind: input, shape index: {}]
  %s3 = inlined_call_operand.vmem [shape: f32[1,128], index: 3, kind: input, shape index: {}]
  %s4 = inlined_call_operand.<no memory space> [shape: f32[1,1], index: 4, kind: input, shape index: {}]
  %s5 = inlined_call_operand.hbm [shape: f32[1,1,128], index: 5, kind: output, shape index: {}]
  %s6 = sld [smem:[#allocation0]]
  $region30: #{tpu_custom_call.1} parent=0
    _
  %s8 = ssub.s32 1, %s6
  %s9 = scalar_select 0, %s8, %s6
  %10 = sst [smem:[#allocation2]] %s4
  $region1: #{tpu_custom_call.1} parent=0
    #allocation3 [shape = 'u8[512]{0}', space=vmem, size = 0x400, scoped, tag = 'output window, operand 0, single buffered']
    #allocation4 [shape = 's32[1]{0}', space=sflag, size = 0x4, scoped, tag = 'scoped memory for tpu_custom_call.1']
    %11 = vsyncpa [#allocation4], 0
    // Predicated region
    $region2: #{tpu_custom_call.1} parent=1 // pred_check
      _
    $region3: #{tpu_custom_call.1} parent=1 // pred_check_branch
      %13 = sbr.rel (0) target = $region5
    $region4: #{tpu_custom_call.1} parent=1 // pred_region
      _
    $region5: #{tpu_custom_call.1} parent=1 // pred_fallthru
      _
    // Predicated region
    $region6: #{tpu_custom_call.1} parent=1 // pred_check
      _
    $region7: #{tpu_custom_call.1} parent=1 // pred_check_branch
      %15 = sbr.rel (0) target = $region9
    $region8: #{tpu_custom_call.1} parent=1 // pred_region
      _
    $region9: #{tpu_custom_call.1} parent=1 // pred_fallthru
      _
    // Predicated region
    $region10: #{tpu_custom_call.1} parent=1 // pred_check
      _
    $region11: #{tpu_custom_call.1} parent=1 // pred_check_branch
      %17 = sbr.rel (0) target = $region13
    $region12: #{tpu_custom_call.1} parent=1 // pred_region
      _
    $region13: #{tpu_custom_call.1} parent=1 // pred_fallthru
      _
    // Predicated region
    $region14: #{tpu_custom_call.1} parent=1 // pred_check
      _
    $region15: #{tpu_custom_call.1} parent=1 // pred_check_branch
      %19 = sbr.rel (0) target = $region17
    $region16: #{tpu_custom_call.1} parent=1 // pred_region
      _
    $region17: #{tpu_custom_call.1} parent=1 // pred_fallthru
      _
    // Predicated region
    $region18: #{tpu_custom_call.1} parent=1 // pred_check
      _
    $region19: #{tpu_custom_call.1} parent=1 // pred_check_branch
      %21 = sbr.rel (0) target = $region21
    $region20: #{tpu_custom_call.1} parent=1 // pred_region
      _
    $region21: #{tpu_custom_call.1} parent=1 // pred_fallthru
      _
    %v22 = vld [vmem:[%s0] sm:$0xff]
    %v23 = vld [vmem:[%s0 + $0x8] sm:$0xff]
    %v24 = vld [vmem:[%s0 + $0x10] sm:$0xff]
    %v25 = vld [vmem:[%s0 + $0x18] sm:$0xff]
    %v26 = vld [vmem:[%s0 + $0x20] sm:$0xff]
    %v27 = vld [vmem:[%s0 + $0x28] sm:$0xff]
    %v28 = vld [vmem:[%s0 + $0x30] sm:$0xff]
    %v29 = vld [vmem:[%s0 + $0x38] sm:$0xff]
    %v30 = vld [vmem:[%s0 + $0x40] sm:$0xff]
    %v31 = vld [vmem:[%s0 + $0x48] sm:$0xff]
    %v32 = vld [vmem:[%s0 + $0x50] sm:$0xff]
    %v33 = vld [vmem:[%s0 + $0x58] sm:$0xff]
    %v34 = vld [vmem:[%s0 + $0x60] sm:$0xff]
    %v35 = vld [vmem:[%s0 + $0x68] sm:$0xff]
    %v36 = vld [vmem:[%s0 + $0x70] sm:$0xff]
    %v37 = vld [vmem:[%s0 + $0x78] sm:$0xff]
    %v38 = vld [vmem:[%s1] sm:$0xff]
    %v39 = vld [vmem:[%s2] sm:$0x1]
    %v41 = vperm.slane %v39, 0
    %vm43 = vcmask 64512
    %v45 = vsel %vm43, %v22, 0
    %v48 = vsel %vm43, %v23, 0
    %v51 = vsel %vm43, %v24, 0
    %v54 = vsel %vm43, %v25, 0
    %v57 = vsel %vm43, %v26, 0
    %v60 = vsel %vm43, %v27, 0
    %v63 = vsel %vm43, %v28, 0
    %v66 = vsel %vm43, %v29, 0
    %v69 = vsel %vm43, %v30, 0
    %v72 = vsel %vm43, %v31, 0
    %v75 = vsel %vm43, %v32, 0
    %v78 = vsel %vm43, %v33, 0
    %v81 = vsel %vm43, %v34, 0
    %v84 = vsel %vm43, %v35, 0
    %v87 = vsel %vm43, %v36, 0
    %v90 = vsel %vm43, %v37, 0
    %92 = vmatpush.msra.mxu0 0.0
    %93 = vmatpush.msra.mxu0 0.0
    %94 = vmatpush.msra.mxu0 0.0
    %95 = vmatpush.msra.mxu0 0.0
    %96 = vmatpush.msra.mxu0 0.0
    %97 = vmatpush.msra.mxu0 0.0
    %98 = vmatpush.msra.mxu0 0.0
    %99 = vmatpush.msra.mxu0 0.0
    %100 = vmatpush.msra.mxu0 0.0
    %101 = vmatpush.msra.mxu0 0.0
    %102 = vmatpush.msra.mxu0 0.0
    %103 = vmatpush.msra.mxu0 0.0
    %104 = vmatpush.msra.mxu0 0.0
    %105 = vmatpush.msra.mxu0 0.0
    %106 = vmatpush.msra.mxu0 0.0
    %107 = vmatpush.msra.mxu0 %v38
    %108 = vmatmul.f32.gmra.mxu0 %v45
    %v109 = vpop.f32.mrf.mxu0
    %v110 = vadd.f32 %v41, %v109
    %111 = vmatmul.f32.gmra.mxu0 %v48
    %v112 = vpop.f32.mrf.mxu0
    %v113 = vadd.f32 %v41, %v112
    %114 = vmatmul.f32.gmra.mxu0 %v51
    %v115 = vpop.f32.mrf.mxu0
    %v116 = vadd.f32 %v41, %v115
    %117 = vmatmul.f32.gmra.mxu0 %v54
    %v118 = vpop.f32.mrf.mxu0
    %v119 = vadd.f32 %v41, %v118
    %120 = vmatmul.f32.gmra.mxu0 %v57
    %v121 = vpop.f32.mrf.mxu0
    %v122 = vadd.f32 %v41, %v121
    %123 = vmatmul.f32.gmra.mxu0 %v60
    %v124 = vpop.f32.mrf.mxu0
    %v125 = vadd.f32 %v41, %v124
    %126 = vmatmul.f32.gmra.mxu0 %v63
    %v127 = vpop.f32.mrf.mxu0
    %v128 = vadd.f32 %v41, %v127
    %129 = vmatmul.f32.gmra.mxu0 %v66
    %v130 = vpop.f32.mrf.mxu0
    %v131 = vadd.f32 %v41, %v130
    %132 = vmatmul.f32.gmra.mxu0 %v69
    %v133 = vpop.f32.mrf.mxu0
    %v134 = vadd.f32 %v41, %v133
    %135 = vmatmul.f32.gmra.mxu0 %v72
    %v136 = vpop.f32.mrf.mxu0
    %v137 = vadd.f32 %v41, %v136
    %138 = vmatmul.f32.gmra.mxu0 %v75
    %v139 = vpop.f32.mrf.mxu0
    %v140 = vadd.f32 %v41, %v139
    %141 = vmatmul.f32.gmra.mxu0 %v78
    %v142 = vpop.f32.mrf.mxu0
    %v143 = vadd.f32 %v41, %v142
    %144 = vmatmul.f32.gmra.mxu0 %v81
    %v145 = vpop.f32.mrf.mxu0
    %v146 = vadd.f32 %v41, %v145
    %147 = vmatmul.f32.gmra.mxu0 %v84
    %v148 = vpop.f32.mrf.mxu0
    %v149 = vadd.f32 %v41, %v148
    %150 = vmatmul.f32.gmra.mxu0 %v87
    %v151 = vpop.f32.mrf.mxu0
    %v152 = vadd.f32 %v41, %v151
    %153 = vmatmul.f32.gmra.mxu0 %v90
    %v154 = vpop.f32.mrf.mxu0
    %v155 = vadd.f32 %v41, %v154
    %156 = vdwg.mxu0
    %v157 = vmax.f32 %v110, 0.0
    %v158 = vmax.f32 %v113, 0.0
    %v159 = vmax.f32 %v116, 0.0
    %v160 = vmax.f32 %v119, 0.0
    %v161 = vmax.f32 %v122, 0.0
    %v162 = vmax.f32 %v125, 0.0
    %v163 = vmax.f32 %v128, 0.0
    %v164 = vmax.f32 %v131, 0.0
    %v165 = vmax.f32 %v134, 0.0
    %v166 = vmax.f32 %v137, 0.0
    %v167 = vmax.f32 %v140, 0.0
    %v168 = vmax.f32 %v143, 0.0
    %v169 = vmax.f32 %v146, 0.0
    %v170 = vmax.f32 %v149, 0.0
    %v171 = vmax.f32 %v152, 0.0
    %v172 = vmax.f32 %v155, 0.0
    %v173 = vld [vmem:[%s3] sm:$0x1]
    %v175 = vperm.slane %v173, 0
    %v177 = vmul.f32 %v157, %v175
    %v178 = vmul.f32 %v158, %v175
    %v179 = vmul.f32 %v159, %v175
    %v180 = vmul.f32 %v160, %v175
    %v181 = vmul.f32 %v161, %v175
    %v182 = vmul.f32 %v162, %v175
    %v183 = vmul.f32 %v163, %v175
    %v184 = vmul.f32 %v164, %v175
    %v185 = vmul.f32 %v165, %v175
    %v186 = vmul.f32 %v166, %v175
    %v187 = vmul.f32 %v167, %v175
    %v188 = vmul.f32 %v168, %v175
    %v189 = vmul.f32 %v169, %v175
    %v190 = vmul.f32 %v170, %v175
    %v191 = vmul.f32 %v171, %v175
    %v192 = vmul.f32 %v172, %v175
    %193 = vadd.xlane.f32.xlu0 %v177
    %v194 = vpop.xlane.xlu0 %193
    %195 = vadd.xlane.f32.xlu0 %v178
    %v196 = vpop.xlane.xlu0 %195
    %197 = vadd.xlane.f32.xlu0 %v179
    %v198 = vpop.xlane.xlu0 %197
    %199 = vadd.xlane.f32.xlu0 %v180
    %v200 = vpop.xlane.xlu0 %199
    %201 = vadd.xlane.f32.xlu0 %v181
    %v202 = vpop.xlane.xlu0 %201
    %203 = vadd.xlane.f32.xlu0 %v182
    %v204 = vpop.xlane.xlu0 %203
    %205 = vadd.xlane.f32.xlu0 %v183
    %v206 = vpop.xlane.xlu0 %205
    %207 = vadd.xlane.f32.xlu0 %v184
    %v208 = vpop.xlane.xlu0 %207
    %209 = vadd.xlane.f32.xlu0 %v185
    %v210 = vpop.xlane.xlu0 %209
    %211 = vadd.xlane.f32.xlu0 %v186
    %v212 = vpop.xlane.xlu0 %211
    %213 = vadd.xlane.f32.xlu0 %v187
    %v214 = vpop.xlane.xlu0 %213
    %215 = vadd.xlane.f32.xlu0 %v188
    %v216 = vpop.xlane.xlu0 %215
    %217 = vadd.xlane.f32.xlu0 %v189
    %v218 = vpop.xlane.xlu0 %217
    %219 = vadd.xlane.f32.xlu0 %v190
    %v220 = vpop.xlane.xlu0 %219
    %221 = vadd.xlane.f32.xlu0 %v191
    %v222 = vpop.xlane.xlu0 %221
    %223 = vadd.xlane.f32.xlu0 %v192
    %v224 = vpop.xlane.xlu0 %223
    %s225 = sld [smem:[#allocation2]]
    %v226 = vstv %s225
    %v227 = vadd.f32 %v194, %v226
    %v228 = vadd.f32 %v196, %v226
    %v229 = vadd.f32 %v198, %v226
    %v230 = vadd.f32 %v200, %v226
    %v231 = vadd.f32 %v202, %v226
    %v232 = vadd.f32 %v204, %v226
    %v233 = vadd.f32 %v206, %v226
    %v234 = vadd.f32 %v208, %v226
    %v235 = vadd.f32 %v210, %v226
    %v236 = vadd.f32 %v212, %v226
    %v237 = vadd.f32 %v214, %v226
    %v238 = vadd.f32 %v216, %v226
    %v239 = vadd.f32 %v218, %v226
    %v240 = vadd.f32 %v220, %v226
    %v241 = vadd.f32 %v222, %v226
    %v242 = vadd.f32 %v224, %v226
    %v259 = vlaneseq
    %v260 = vand.u32 %v259, 127
    %v261 = vperm.slane %v227, %v260
    %v262 = vadd.s32 %v260, 4294967288
    %v263 = vperm.slane %v228, %v262
    %vm264 = vcmask 130112
    %v265 = vsel %vm264, %v263, %v261
    %v266 = vadd.s32 %v260, 4294967280
    %v267 = vperm.slane %v229, %v266
    %vm268 = vcmask 195712
    %v269 = vsel %vm268, %v267, %v265
    %v270 = vadd.s32 %v260, 4294967272
    %v271 = vperm.slane %v230, %v270
    %vm272 = vcmask 261312
    %v273 = vsel %vm272, %v271, %v269
    %v274 = vadd.s32 %v260, 4294967264
    %v275 = vperm.slane %v231, %v274
    %vm276 = vcmask 326912
    %v277 = vsel %vm276, %v275, %v273
    %v278 = vadd.s32 %v260, 4294967256
    %v279 = vperm.slane %v232, %v278
    %vm280 = vcmask 392512
    %v281 = vsel %vm280, %v279, %v277
    %v282 = vadd.s32 %v260, 4294967248
    %v283 = vperm.slane %v233, %v282
    %vm284 = vcmask 458112
    %v285 = vsel %vm284, %v283, %v281
    %v286 = vadd.s32 %v260, 4294967240
    %v287 = vperm.slane %v234, %v286
    %vm288 = vcmask 523712
    %v289 = vsel %vm288, %v287, %v285
    %v290 = vadd.s32 %v260, 4294967232
    %v291 = vperm.slane %v235, %v290
    %vm292 = vcmask 589312
    %v293 = vsel %vm292, %v291, %v289
    %v294 = vadd.s32 %v260, 4294967224
    %v295 = vperm.slane %v236, %v294
    %vm296 = vcmask 654912
    %v297 = vsel %vm296, %v295, %v293
    %v298 = vadd.s32 %v260, 4294967216
    %v299 = vperm.slane %v237, %v298
    %vm300 = vcmask 720512
    %v301 = vsel %vm300, %v299, %v297
    %v302 = vadd.s32 %v260, 4294967208
    %v303 = vperm.slane %v238, %v302
    %vm304 = vcmask 786112
    %v305 = vsel %vm304, %v303, %v301
    %v306 = vadd.s32 %v260, 4294967200
    %v307 = vperm.slane %v239, %v306
    %vm308 = vcmask 851712
    %v309 = vsel %vm308, %v307, %v305
    %v310 = vadd.s32 %v260, 4294967192
    %v311 = vperm.slane %v240, %v310
    %vm312 = vcmask 917312
    %v313 = vsel %vm312, %v311, %v309
    %v314 = vadd.s32 %v260, 4294967184
    %v315 = vperm.slane %v241, %v314
    %vm316 = vcmask 982912
    %v317 = vsel %vm316, %v315, %v313
    %v318 = vadd.s32 %v260, 4294967176
    %v319 = vperm.slane %v242, %v318
    %vm320 = vcmask 1048512
    %v321 = vsel %vm320, %v319, %v317
    %323 = vst [vmem:[#allocation3] sm:$0x1] %v321
    // Predicated region
    $region22: #{tpu_custom_call.1} parent=1 // pred_check
      _
    $region23: #{tpu_custom_call.1} parent=1 // pred_check_branch
      %325 = sbr.rel (0) target = $region25
    $region24: #{tpu_custom_call.1} parent=1 // pred_region
      %327 = vsyncadd [#allocation4], 0
      %s329 = sshll.u32 [#allocation3], 4
      %s330 = int_to_ptr.vmem [resolvable:$true] %s329
      %s331 = sshll.u32 %s5, 4
      %s332 = int_to_ptr.hbm [resolvable:$true] %s331
      %334 = dma.vmem_to_hbm [thread:$0]  %s330, 16, %s332, [#allocation4]
    $region25: #{tpu_custom_call.1} parent=1 // pred_fallthru
      _
    // Predicated region
    $region26: #{tpu_custom_call.1} parent=1 // pred_check
      _
    $region27: #{tpu_custom_call.1} parent=1 // pred_check_branch
      %336 = sbr.rel (0) target = $region29
    $region28: #{tpu_custom_call.1} parent=1 // pred_region
      %338 = dma.done [#allocation4], 16
    $region29: #{tpu_custom_call.1} parent=1 // pred_fallthru
      _
    %339 = vsyncpa [#allocation4], 1

</llo_original>
